<compile_context>
chip_gen: v7x
topology: tpu7x:2x2x1
jax: 0.10.0
libtpu: 0.0.40
codegen_flags: <defaults>
</compile_context>

<pallas_src>
import jax
import jax.numpy as jnp
from jax.experimental import pallas as pl
from jax.experimental.pallas import tpu as pltpu

PATCH_DIM = 14
LN_EPS = 1e-5


def _to_patches_kernel(xt_ref, w_ref, b_ref, g_ref, beta_ref, o_ref):
    # xt_ref:   (PATCH_DIM, tm)  patch elements on sublanes, patch index on lanes
    # w_ref:    (dim, PATCH_DIM) linear weight, torch layout (resident across grid)
    # b_ref:    (1, dim)         linear bias
    # g_ref:    (1, dim)         layernorm gamma
    # beta_ref: (1, dim)         layernorm beta
    # o_ref:    (tm, dim)
    xt = xt_ref[...].astype(jnp.float32)                 # (14, tm)
    w = w_ref[...].astype(jnp.float32)                   # (dim, 14)

    # MXU: (dim, 14) @ (14, tm) -> (dim, tm), f32 accumulate.
    yt = jnp.dot(w, xt, preferred_element_type=jnp.float32)

    # One aligned f32 transpose back to row-major patches, then bias + LN
    # along the lane axis.  Compute units have large slack in this
    # memory-bound kernel, so this hides under the DMA.
    y = yt.T + b_ref[...]                                 # (tm, dim)
    mean = jnp.mean(y, axis=-1, keepdims=True)
    centered = y - mean
    var = jnp.mean(centered * centered, axis=-1, keepdims=True)
    inv = jax.lax.rsqrt(var + LN_EPS)
    o_ref[...] = (centered * inv * g_ref[...] + beta_ref[...]).astype(o_ref.dtype)


def to_patches_forward(x, w, b, gamma, beta, *, tm=1024):
    """x: (B, C, H, W). w: (dim, 14), b/gamma/beta: (dim,). Returns (B, N, dim) f32."""
    B, C, H, W = x.shape
    total = C * H * W
    assert total % PATCH_DIM == 0, "C*H*W must be divisible by 14"
    N = total // PATCH_DIM
    M = B * N
    dim = w.shape[0]

    # Row tile: multiple of 128 (it is the lane dim of the transposed input
    # block), clamped to the padded row count.
    tm = max(128, (tm // 128) * 128)
    tm = min(tm, pl.cdiv(M, 128) * 128)
    n_steps = pl.cdiv(M, tm)
    m_pad = n_steps * tm

    # Glue (plain JAX, one light transpose copy): flatten row-major into patch
    # rows of 14, zero-pad the ragged tail, and hand the kernel the TRANSPOSED
    # (14, m_pad) array so its DMA reads are lane-dense (14 -> 16 sublane
    # padding instead of 14 -> 128 lane padding).
    x_rows = x.reshape(M, PATCH_DIM).astype(jnp.float32)
    if m_pad != M:
        x_rows = jnp.pad(x_rows, ((0, m_pad - M), (0, 0)))
    x_t = x_rows.T                                        # (14, m_pad)

    w_f = w.astype(jnp.float32)                           # (dim, 14)
    b2 = b.astype(jnp.float32).reshape(1, dim)
    g2 = gamma.astype(jnp.float32).reshape(1, dim)
    beta2 = beta.astype(jnp.float32).reshape(1, dim)

    # VMEM budget: double-buffered in/out blocks + elementwise temporaries.
    in_block = 16 * tm * 4
    out_block = tm * dim * 4
    vmem_need = 2 * in_block + 12 * out_block + 4 * (dim * PATCH_DIM + 3 * dim)
    vmem_limit = int(min(max(vmem_need + (4 << 20), 32 << 20), 48 << 20))

    cost = pl.CostEstimate(
        flops=2 * m_pad * PATCH_DIM * dim + 8 * m_pad * dim,
        transcendentals=m_pad,
        bytes_accessed=4 * (PATCH_DIM * m_pad + m_pad * dim + dim * (PATCH_DIM + 3)),
    )

    out = pl.pallas_call(
        _to_patches_kernel,
        out_shape=jax.ShapeDtypeStruct((m_pad, dim), jnp.float32),
        grid=(n_steps,),
        in_specs=[
            pl.BlockSpec((PATCH_DIM, tm), lambda i: (0, i)),   # lane-dense patches
            pl.BlockSpec((dim, PATCH_DIM), lambda i: (0, 0)),  # resident weight
            pl.BlockSpec((1, dim), lambda i: (0, 0)),
            pl.BlockSpec((1, dim), lambda i: (0, 0)),
            pl.BlockSpec((1, dim), lambda i: (0, 0)),
        ],
        out_specs=pl.BlockSpec((tm, dim), lambda i: (i, 0)),
        compiler_params=pltpu.CompilerParams(
            dimension_semantics=("parallel",),
            vmem_limit_bytes=vmem_limit,
        ),
        cost_estimate=cost,
    )(x_t, w_f, b2, g2, beta2)

    return out[:M].reshape(B, N, dim)


def _reference(x, w, b, gamma, beta):
    B = x.shape[0]
    x2 = x.reshape(B, -1).reshape(B, -1, PATCH_DIM)
    y = jnp.einsum("bnk,dk->bnd", x2, w) + b
    mean = jnp.mean(y, axis=-1, keepdims=True)
    var = jnp.mean((y - mean) ** 2, axis=-1, keepdims=True)
    return (y - mean) / jnp.sqrt(var + LN_EPS) * gamma + beta


if __name__ == "__main__":
    # Small shapes consistent with the module: C*H*W divisible by 14.
    B, C, H, W = 2, 4, 14, 40      # C*H*W = 2240 -> 160 patches of 14 per batch
    dim = 128                      # multiple of 128 -> lane-dense output stores

    key = jax.random.PRNGKey(0)
    kx, kw, kb = jax.random.split(key, 3)

    x = jax.random.normal(kx, (B, C, H, W), dtype=jnp.float32)

    # Deterministic parameter init (synthetic; torch-Linear-like scale).
    bound = 1.0 / jnp.sqrt(float(PATCH_DIM))
    w = jax.random.uniform(kw, (dim, PATCH_DIM), jnp.float32, -bound, bound)
    b = jax.random.uniform(kb, (dim,), jnp.float32, -bound, bound)
    gamma = jnp.ones((dim,), jnp.float32)    # LayerNorm default init
    beta = jnp.zeros((dim,), jnp.float32)

    # tm=128 so this small demo still exercises a multi-step grid (3 steps)
    # and the ragged-tail zero-padding path (M=320 rows -> 384 padded rows).
    out = to_patches_forward(x, w, b, gamma, beta, tm=128)
    out = jax.block_until_ready(out)

    ref = _reference(x, w, b, gamma, beta)
    N = (C * H * W) // PATCH_DIM
    assert out.shape == (B, N, dim)
    assert jnp.allclose(out, ref, atol=5e-5, rtol=5e-5), float(jnp.max(jnp.abs(out - ref)))

    print("KERNEL_OK")
</pallas_src>

<mosaic_0001>
module attributes {stable_mosaic.version = 11 : i64} {
  func.func @_to_patches_kernel(%arg0: i32, %arg1: memref<14x128xf32, #tpu.memory_space<vmem>>, %arg2: memref<128x14xf32, #tpu.memory_space<vmem>>, %arg3: memref<1x128xf32, #tpu.memory_space<vmem>>, %arg4: memref<1x128xf32, #tpu.memory_space<vmem>>, %arg5: memref<1x128xf32, #tpu.memory_space<vmem>>, %arg6: memref<128x128xf32, #tpu.memory_space<vmem>>) attributes {dimension_semantics = [#tpu.dimension_semantics<parallel>], iteration_bounds = array<i64: 3>, scalar_prefetch = 0 : i64, scratch_operands = 0 : i64, tpu.core_type = #tpu.core_type<tc>, window_params = [{transform_indices = @transform_0, window_bounds = array<i64: 14, 128>}, {pipeline_mode = #tpu.pipeline_mode<synchronous>, transform_indices = @transform_1, window_bounds = array<i64: 128, 14>}, {pipeline_mode = #tpu.pipeline_mode<synchronous>, transform_indices = @transform_2, window_bounds = array<i64: 1, 128>}, {pipeline_mode = #tpu.pipeline_mode<synchronous>, transform_indices = @transform_3, window_bounds = array<i64: 1, 128>}, {pipeline_mode = #tpu.pipeline_mode<synchronous>, transform_indices = @transform_4, window_bounds = array<i64: 1, 128>}, {transform_indices = @transform_5, window_bounds = array<i64: 128, 128>}]} {
    %c0 = arith.constant 0 : index
    %c0_0 = arith.constant 0 : index
    %0 = vector.load %arg1[%c0, %c0_0] : memref<14x128xf32, #tpu.memory_space<vmem>>, vector<14x128xf32>
    %c0_1 = arith.constant 0 : index
    %c0_2 = arith.constant 0 : index
    %1 = vector.load %arg2[%c0_1, %c0_2] : memref<128x14xf32, #tpu.memory_space<vmem>>, vector<128x14xf32>
    %cst = arith.constant dense<0.000000e+00> : vector<128x128xf32>
    %2 = tpu.matmul %1, %0, %cst {dimension_numbers = #tpu.dot_dimension_numbers<[1], [0], [0], [1], [0, 0, 1, 1], [], []>} : vector<128x14xf32>, vector<14x128xf32>, vector<128x128xf32> -> vector<128x128xf32>
    %3 = tpu.transpose %2, [1, 0] : vector<128x128xf32> -> vector<128x128xf32>
    %c0_3 = arith.constant 0 : index
    %c0_4 = arith.constant 0 : index
    %4 = vector.load %arg3[%c0_3, %c0_4] : memref<1x128xf32, #tpu.memory_space<vmem>>, vector<1x128xf32>
    %5 = vector.broadcast %4 : vector<1x128xf32> to vector<128x128xf32>
    %6 = arith.addf %3, %5 : vector<128x128xf32>
    %cst_5 = arith.constant dense<0.000000e+00> : vector<128xf32>
    %7 = vector.multi_reduction <add>, %6, %cst_5 [1] : vector<128x128xf32> to vector<128xf32>
    %8 = vector.shape_cast %7 : vector<128xf32> to vector<128x1xf32>
    %cst_6 = arith.constant 1.280000e+02 : f32
    %9 = vector.broadcast %cst_6 : f32 to vector<128x1xf32>
    %10 = arith.divf %8, %9 : vector<128x1xf32>
    %11 = vector.broadcast %10 : vector<128x1xf32> to vector<128x128xf32>
    %12 = arith.subf %6, %11 : vector<128x128xf32>
    %13 = arith.mulf %12, %12 : vector<128x128xf32>
    %cst_7 = arith.constant dense<0.000000e+00> : vector<128xf32>
    %14 = vector.multi_reduction <add>, %13, %cst_7 [1] : vector<128x128xf32> to vector<128xf32>
    %15 = vector.shape_cast %14 : vector<128xf32> to vector<128x1xf32>
    %cst_8 = arith.constant 1.280000e+02 : f32
    %16 = vector.broadcast %cst_8 : f32 to vector<128x1xf32>
    %17 = arith.divf %15, %16 : vector<128x1xf32>
    %cst_9 = arith.constant 9.99999974E-6 : f32
    %18 = vector.broadcast %cst_9 : f32 to vector<128x1xf32>
    %19 = arith.addf %17, %18 : vector<128x1xf32>
    %20 = math.rsqrt %19 : vector<128x1xf32>
    %21 = vector.broadcast %20 : vector<128x1xf32> to vector<128x128xf32>
    %22 = arith.mulf %12, %21 : vector<128x128xf32>
    %c0_10 = arith.constant 0 : index
    %c0_11 = arith.constant 0 : index
    %23 = vector.load %arg4[%c0_10, %c0_11] : memref<1x128xf32, #tpu.memory_space<vmem>>, vector<1x128xf32>
    %24 = vector.broadcast %23 : vector<1x128xf32> to vector<128x128xf32>
    %25 = arith.mulf %22, %24 : vector<128x128xf32>
    %c0_12 = arith.constant 0 : index
    %c0_13 = arith.constant 0 : index
    %26 = vector.load %arg5[%c0_12, %c0_13] : memref<1x128xf32, #tpu.memory_space<vmem>>, vector<1x128xf32>
    %27 = vector.broadcast %26 : vector<1x128xf32> to vector<128x128xf32>
    %28 = arith.addf %25, %27 : vector<128x128xf32>
    %c0_14 = arith.constant 0 : index
    %c0_15 = arith.constant 0 : index
    %29 = vector.load %arg6[%c0_14, %c0_15] : memref<128x128xf32, #tpu.memory_space<vmem>>, vector<128x128xf32>
    tpu.vector_store %arg6[%c0_14, %c0_15], %28 {strides = array<i32>} : memref<128x128xf32, #tpu.memory_space<vmem>>, vector<128x128xf32>,
    return
  }
  func.func @transform_0(%arg0: i32) -> (i32, i32) {
    %c0_i32 = arith.constant 0 : i32
    %c0_i32_0 = arith.constant 0 : i32
    return %c0_i32, %arg0 : i32, i32
  }
  func.func @transform_1(%arg0: i32) -> (i32, i32) {
    %c0_i32 = arith.constant 0 : i32
    %c0_i32_0 = arith.constant 0 : i32
    %c0_i32_1 = arith.constant 0 : i32
    return %c0_i32, %c0_i32_0 : i32, i32
  }
  func.func @transform_2(%arg0: i32) -> (i32, i32) {
    %c0_i32 = arith.constant 0 : i32
    %c0_i32_0 = arith.constant 0 : i32
    %c0_i32_1 = arith.constant 0 : i32
    return %c0_i32, %c0_i32_0 : i32, i32
  }
  func.func @transform_3(%arg0: i32) -> (i32, i32) {
    %c0_i32 = arith.constant 0 : i32
    %c0_i32_0 = arith.constant 0 : i32
    %c0_i32_1 = arith.constant 0 : i32
    return %c0_i32, %c0_i32_0 : i32, i32
  }
  func.func @transform_4(%arg0: i32) -> (i32, i32) {
    %c0_i32 = arith.constant 0 : i32
    %c0_i32_0 = arith.constant 0 : i32
    %c0_i32_1 = arith.constant 0 : i32
    return %c0_i32, %c0_i32_0 : i32, i32
  }
  func.func @transform_5(%arg0: i32) -> (i32, i32) {
    %c0_i32 = arith.constant 0 : i32
    %c0_i32_0 = arith.constant 0 : i32
    return %arg0, %c0_i32 : i32, i32
  }
}

</mosaic_0001>

<llo_original>
// kernel: tpu_custom_call.1
$region0: #{tpu_custom_call.1}
  #allocation0 [shape = 'u32[]', space=smem, size = 0x4, offset = 0x4, fixed_abs, tag = 'smem constant byte address 0x4 - core index']
  #allocation1 [shape = 'u32[144,128]{1,0:T(1,128)}', space=vmem, size = 0x12000, scoped, tag = 'internal scratch']
  %s0 = inlined_call_operand.vmem [shape: f32[14,384], index: 0, kind: input, shape index: {}]
  %s1 = inlined_call_operand.vmem [shape: f32[128,14], index: 1, kind: input, shape index: {}]
  %s2 = inlined_call_operand.vmem [shape: f32[1,128], index: 2, kind: input, shape index: {}]
  %s3 = inlined_call_operand.vmem [shape: f32[1,128], index: 3, kind: input, shape index: {}]
  %s4 = inlined_call_operand.vmem [shape: f32[1,128], index: 4, kind: input, shape index: {}]
  %s5 = inlined_call_operand.hbm [shape: f32[384,128], index: 5, kind: output, shape index: {}]
  %s6 = sld [smem:[#allocation0]]
  $region91: #{tpu_custom_call.1} parent=0
    _
  %s8 = ssub.s32 1, %s6
  %s9 = scalar_select 0, %s8, %s6
  $region1: #{tpu_custom_call.1} parent=0
    #allocation2 [shape = 'u8[16384]{0}', space=vmem, size = 0x4000, scoped, tag = 'input window, operand 0']
    #allocation3 [shape = 'u8[131072]{0}', space=vmem, size = 0x20000, scoped, tag = 'output window, operand 0']
    #allocation4 [shape = 's32[2]{0}', space=sflag, size = 0x8, scoped, tag = 'scoped memory for tpu_custom_call.1']
    %10 = vsyncpa [#allocation4], 0
    %s11 = scalar_lea.sflag [#allocation4], 1
    %12 = vsyncpa %s11, 0
    loop: start=0, step=1, limit=5
    $region2: #{tpu_custom_call.1} parent=1 // loop_pre_header
      _
    $region3: #{tpu_custom_call.1} parent=1 // loop_header
      %s14 = sphi 0, %s18
      %p15 = scmp.ge.s32.totalorder %s14, 5
      %s24 = sphi 0, %s26
      %s27 = sphi 0, %s24
      %s28 = sphi 0, %s27
      %s44 = sphi 0, %s28
      %s48 = sphi 0, %s48
      %s50 = sphi 0, %s48
      %s51 = sphi 0, %s50
      %s65 = sphi 0, %s51
      %s69 = sphi 0, %s69
      %s71 = sphi 0, %s69
      %s72 = sphi 0, %s71
      %s86 = sphi 0, %s72
      %s90 = sphi 0, %s90
      %s92 = sphi 0, %s90
      %s93 = sphi 0, %s92
      %s107 = sphi 0, %s93
      %s111 = sphi 0, %s111
      %s113 = sphi 0, %s111
      %s114 = sphi 0, %s113
      %s128 = sphi 0, %s114
      %s134 = sphi 0, %s136
      %s137 = sphi 0, %s134
      %s138 = sphi 0, %s137
      %s154 = sphi 0, %s138
    $region4: #{tpu_custom_call.1} parent=1 // loop_header_branch
      %17 = sbr.rel (%p15) target = $region8
    $region5: #{tpu_custom_call.1} parent=1 // loop_body
      %s19 = ssub.s32 %s14, 1
      %s20 = ssub.s32 %s14, 2
      %s21 = sadd.s32 %s14, 1
      %s22 = ssub.s32 %s14, %s21
      %p23 = scmp.eq.s32.totalorder %s22, 0
      %s25 = sadd.s32 %s24, 1
      %s26 = scalar_select %p23, %s24, %s25
      %p29 = pneg %p23
      %p30 = scmp.eq.s32.totalorder %s14, 2
      %p31 = por %p29, %p30
      %p32 = scmp.ne.s32.totalorder %s24, %s27
      %p33 = scmp.eq.s32.totalorder %s14, 0
      %p34 = por %p32, %p33
      %p35 = scmp.ne.s32.totalorder %s24, %s27
      %p36 = scmp.eq.s32.totalorder %s19, 2
      %p37 = por %p35, %p36
      %p38 = scmp.ne.s32.totalorder %s27, %s28
      %p39 = scmp.eq.s32.totalorder %s19, 0
      %p40 = por %p38, %p39
      %p41 = scmp.ne.s32.totalorder %s27, %s28
      %p42 = scmp.eq.s32.totalorder %s20, 2
      %p43 = por %p41, %p42
      %p45 = scmp.ne.s32.totalorder %s28, %s44
      %p46 = scmp.eq.s32.totalorder %s20, 0
      %p47 = por %p45, %p46
      %s49 = sadd.s32 %s48, 1
      %p52 = scmp.eq.s32.totalorder %s14, 2
      %p53 = scmp.ne.s32.totalorder %s48, %s50
      %p54 = scmp.eq.s32.totalorder %s14, 0
      %p55 = por %p53, %p54
      %p56 = scmp.ne.s32.totalorder %s48, %s50
      %p57 = scmp.eq.s32.totalorder %s19, 2
      %p58 = por %p56, %p57
      %p59 = scmp.ne.s32.totalorder %s50, %s51
      %p60 = scmp.eq.s32.totalorder %s19, 0
      %p61 = por %p59, %p60
      %p62 = scmp.ne.s32.totalorder %s50, %s51
      %p63 = scmp.eq.s32.totalorder %s20, 2
      %p64 = por %p62, %p63
      %p66 = scmp.ne.s32.totalorder %s51, %s65
      %p67 = scmp.eq.s32.totalorder %s20, 0
      %p68 = por %p66, %p67
      %s70 = sadd.s32 %s69, 1
      %p73 = scmp.eq.s32.totalorder %s14, 2
      %p74 = scmp.ne.s32.totalorder %s69, %s71
      %p75 = scmp.eq.s32.totalorder %s14, 0
      %p76 = por %p74, %p75
      %p77 = scmp.ne.s32.totalorder %s69, %s71
      %p78 = scmp.eq.s32.totalorder %s19, 2
      %p79 = por %p77, %p78
      %p80 = scmp.ne.s32.totalorder %s71, %s72
      %p81 = scmp.eq.s32.totalorder %s19, 0
      %p82 = por %p80, %p81
      %p83 = scmp.ne.s32.totalorder %s71, %s72
      %p84 = scmp.eq.s32.totalorder %s20, 2
      %p85 = por %p83, %p84
      %p87 = scmp.ne.s32.totalorder %s72, %s86
      %p88 = scmp.eq.s32.totalorder %s20, 0
      %p89 = por %p87, %p88
      %s91 = sadd.s32 %s90, 1
      %p94 = scmp.eq.s32.totalorder %s14, 2
      %p95 = scmp.ne.s32.totalorder %s90, %s92
      %p96 = scmp.eq.s32.totalorder %s14, 0
      %p97 = por %p95, %p96
      %p98 = scmp.ne.s32.totalorder %s90, %s92
      %p99 = scmp.eq.s32.totalorder %s19, 2
      %p100 = por %p98, %p99
      %p101 = scmp.ne.s32.totalorder %s92, %s93
      %p102 = scmp.eq.s32.totalorder %s19, 0
      %p103 = por %p101, %p102
      %p104 = scmp.ne.s32.totalorder %s92, %s93
      %p105 = scmp.eq.s32.totalorder %s20, 2
      %p106 = por %p104, %p105
      %p108 = scmp.ne.s32.totalorder %s93, %s107
      %p109 = scmp.eq.s32.totalorder %s20, 0
      %p110 = por %p108, %p109
      %s112 = sadd.s32 %s111, 1
      %p115 = scmp.eq.s32.totalorder %s14, 2
      %p116 = scmp.ne.s32.totalorder %s111, %s113
      %p117 = scmp.eq.s32.totalorder %s14, 0
      %p118 = por %p116, %p117
      %p119 = scmp.ne.s32.totalorder %s111, %s113
      %p120 = scmp.eq.s32.totalorder %s19, 2
      %p121 = por %p119, %p120
      %p122 = scmp.ne.s32.totalorder %s113, %s114
      %p123 = scmp.eq.s32.totalorder %s19, 0
      %p124 = por %p122, %p123
      %p125 = scmp.ne.s32.totalorder %s113, %s114
      %p126 = scmp.eq.s32.totalorder %s20, 2
      %p127 = por %p125, %p126
      %p129 = scmp.ne.s32.totalorder %s114, %s128
      %p130 = scmp.eq.s32.totalorder %s20, 0
      %p131 = por %p129, %p130
      %s132 = ssub.s32 %s14, %s21
      %p133 = scmp.eq.s32.totalorder %s132, 0
      %s135 = sadd.s32 %s134, 1
      %s136 = scalar_select %p133, %s134, %s135
      %p139 = pneg %p133
      %p140 = scmp.eq.s32.totalorder %s14, 2
      %p141 = por %p139, %p140
      %p142 = scmp.ne.s32.totalorder %s134, %s137
      %p143 = scmp.eq.s32.totalorder %s14, 0
      %p144 = por %p142, %p143
      %p145 = scmp.ne.s32.totalorder %s134, %s137
      %p146 = scmp.eq.s32.totalorder %s19, 2
      %p147 = por %p145, %p146
      %p148 = scmp.ne.s32.totalorder %s137, %s138
      %p149 = scmp.eq.s32.totalorder %s19, 0
      %p150 = por %p148, %p149
      %p151 = scmp.ne.s32.totalorder %s137, %s138
      %p152 = scmp.eq.s32.totalorder %s20, 2
      %p153 = por %p151, %p152
      %p155 = scmp.ne.s32.totalorder %s138, %s154
      %p156 = scmp.eq.s32.totalorder %s20, 0
      %p157 = por %p155, %p156
      %p158 = scmp.le.s32.totalorder 1, %s14
      %p159 = scmp.lt.s32.totalorder %s14, 4
      %p160 = pnand %p158, %p159
      %p161 = pneg %p160
      // Predicated region
      $region9: #{tpu_custom_call.1} parent=5 // pred_check
        _
      $region10: #{tpu_custom_call.1} parent=5 // pred_check_branch
        %163 = sbr.rel (%p160) target = $region12
      $region11: #{tpu_custom_call.1} parent=5 // pred_region
        %s164 = ssub.s32 %s14, 1
        // Predicated region
        $region13: #{tpu_custom_call.1} parent=11 // pred_check
          %p165 = pneg %p61
        $region14: #{tpu_custom_call.1} parent=11 // pred_check_branch
          %167 = sbr.rel (%p165) target = $region16
        $region15: #{tpu_custom_call.1} parent=11 // pred_region
          _
        $region16: #{tpu_custom_call.1} parent=11 // pred_fallthru
          _
        // Predicated region
        $region17: #{tpu_custom_call.1} parent=11 // pred_check
          %p168 = pneg %p82
        $region18: #{tpu_custom_call.1} parent=11 // pred_check_branch
          %170 = sbr.rel (%p168) target = $region20
        $region19: #{tpu_custom_call.1} parent=11 // pred_region
          _
        $region20: #{tpu_custom_call.1} parent=11 // pred_fallthru
          _
        // Predicated region
        $region21: #{tpu_custom_call.1} parent=11 // pred_check
          %p171 = pneg %p103
        $region22: #{tpu_custom_call.1} parent=11 // pred_check_branch
          %173 = sbr.rel (%p171) target = $region24
        $region23: #{tpu_custom_call.1} parent=11 // pred_region
          _
        $region24: #{tpu_custom_call.1} parent=11 // pred_fallthru
          _
        // Predicated region
        $region25: #{tpu_custom_call.1} parent=11 // pred_check
          %p174 = pneg %p124
        $region26: #{tpu_custom_call.1} parent=11 // pred_check_branch
          %176 = sbr.rel (%p174) target = $region28
        $region27: #{tpu_custom_call.1} parent=11 // pred_region
          _
        $region28: #{tpu_custom_call.1} parent=11 // pred_fallthru
          _
      $region12: #{tpu_custom_call.1} parent=5 // pred_fallthru
        _
      %p177 = scmp.lt.s32.totalorder %s14, 3
      // Predicated region
      $region29: #{tpu_custom_call.1} parent=5 // pred_check
        %p178 = pneg %p177
      $region30: #{tpu_custom_call.1} parent=5 // pred_check_branch
        %180 = sbr.rel (%p178) target = $region32
      $region31: #{tpu_custom_call.1} parent=5 // pred_region
        // Predicated region
        $region33: #{tpu_custom_call.1} parent=31 // pred_check
          %p181 = pneg %p34
        $region34: #{tpu_custom_call.1} parent=31 // pred_check_branch
          %183 = sbr.rel (%p181) target = $region36
        $region35: #{tpu_custom_call.1} parent=31 // pred_region
          %s184 = sand.u32 %s24, 1
          %s185 = sand.u32 %s24, 1
          %s186 = smul.addr %s185, 16
          %s187 = scalar_lea.vmem [#allocation2], %s186
          %s188 = smul.addr %s14, 8
          %s189 = scalar_lea.vmem %s0, %s188
          // Predicated region
          $region37: #{tpu_custom_call.1} parent=35 // pred_check
            _
          $region38: #{tpu_custom_call.1} parent=35 // pred_check_branch
            %191 = sbr.rel (0) target = $region40
          $region39: #{tpu_custom_call.1} parent=35 // pred_region
            // Predicated region
            $region41: #{tpu_custom_call.1} parent=39 // pred_check
              _
            $region42: #{tpu_custom_call.1} parent=39 // pred_check_branch
              %193 = sbr.rel (0) target = $region44
            $region43: #{tpu_custom_call.1} parent=39 // pred_region
              // Predicated region
              $region56: #{tpu_custom_call.1} parent=43 // pred_check
                _
              $region57: #{tpu_custom_call.1} parent=43 // pred_check_branch
                %210 = sbr.rel (0) target = $region59
              $region58: #{tpu_custom_call.1} parent=43 // pred_region
                loop: start=0, step=1, limit=1
                $region60: #{tpu_custom_call.1} parent=58 // loop_pre_header
                  _
                $region61: #{tpu_custom_call.1} parent=58 // loop_header
                  %s212 = sphi 0, %s216
                  %p213 = scmp.ge.s32.totalorder %s212, 1
                  %s217 = sphi %s189, %s189
                  %s218 = sphi %s187, %s187
                $region62: #{tpu_custom_call.1} parent=58 // loop_header_branch
                  %215 = sbr.rel (%p213) target = $region66
                $region63: #{tpu_custom_call.1} parent=58 // loop_body
                  %v219 = vld [vmem:[%s217] sm:$0xff]
                  %220 = vst [vmem:[%s218] sm:$0xff] %v219
                  %v221 = vld [vmem:[%s217 + $0x18] sm:$0xff]
                  %222 = vst [vmem:[%s218 + $0x8] sm:$0xff] %v221
                $region64: #{tpu_custom_call.1} parent=58 // loop_footer
                  %s216 = sadd.s32 1, %s212
                $region65: #{tpu_custom_call.1} parent=58 // loop_footer_branch
                  %211 = sbr.rel target = $region61
                $region66: #{tpu_custom_call.1} parent=58 // loop_exit
                  _
              $region59: #{tpu_custom_call.1} parent=43 // pred_fallthru
                _
              // Predicated region
              $region67: #{tpu_custom_call.1} parent=43 // pred_check
                _
              $region68: #{tpu_custom_call.1} parent=43 // pred_check_branch
                %224 = sbr.rel target = $region70
              $region69: #{tpu_custom_call.1} parent=43 // pred_region
                _
              $region70: #{tpu_custom_call.1} parent=43 // pred_fallthru
                _
            $region44: #{tpu_custom_call.1} parent=39 // pred_fallthru
              _
            // Predicated region
            $region45: #{tpu_custom_call.1} parent=39 // pred_check
              _
            $region46: #{tpu_custom_call.1} parent=39 // pred_check_branch
              %195 = sbr.rel target = $region48
            $region47: #{tpu_custom_call.1} parent=39 // pred_region
              loop: start=0, step=1, limit=1
              $region49: #{tpu_custom_call.1} parent=47 // loop_pre_header
                _
              $region50: #{tpu_custom_call.1} parent=47 // loop_header
                %s198 = sphi 0, %s202
                %p199 = scmp.ge.s32.totalorder %s198, 1
                %s203 = sphi %s189, %s189
                %s204 = sphi %s187, %s187
              $region51: #{tpu_custom_call.1} parent=47 // loop_header_branch
                %201 = sbr.rel (%p199) target = $region55
              $region52: #{tpu_custom_call.1} parent=47 // loop_body
                %v205 = vld [vmem:[%s203] sm:$0xff]
                %206 = vst [vmem:[%s204] sm:$0xff] %v205
                %v207 = vld [vmem:[%s203 + $0x18] sm:$0xff]
                %208 = vst [vmem:[%s204 + $0x8] sm:$0xff] %v207
              $region53: #{tpu_custom_call.1} parent=47 // loop_footer
                %s202 = sadd.s32 1, %s198
              $region54: #{tpu_custom_call.1} parent=47 // loop_footer_branch
                %197 = sbr.rel target = $region50
              $region55: #{tpu_custom_call.1} parent=47 // loop_exit
                _
            $region48: #{tpu_custom_call.1} parent=39 // pred_fallthru
              _
          $region40: #{tpu_custom_call.1} parent=35 // pred_fallthru
            _
          %225 = vnop
        $region36: #{tpu_custom_call.1} parent=31 // pred_fallthru
          _
      $region32: #{tpu_custom_call.1} parent=5 // pred_fallthru
        _
      %p226 = scmp.le.s32.totalorder 1, %s14
      %p227 = scmp.lt.s32.totalorder %s14, 4
      %p228 = pnand %p226, %p227
      %p229 = pneg %p228
      // Predicated region
      $region71: #{tpu_custom_call.1} parent=5 // pred_check
        _
      $region72: #{tpu_custom_call.1} parent=5 // pred_check_branch
        %231 = sbr.rel (%p228) target = $region74
      $region73: #{tpu_custom_call.1} parent=5 // pred_region
        %s232 = ssub.s32 %s14, 1
        %s233 = sand.u32 %s27, 1
        %s234 = sand.u32 %s27, 1
        %s235 = smul.addr %s234, 16
        %s236 = scalar_lea.vmem [#allocation2], %s235
        // Predicated region
        $region75: #{tpu_custom_call.1} parent=73 // pred_check
          %p237 = pneg %p40
        $region76: #{tpu_custom_call.1} parent=73 // pred_check_branch
          %239 = sbr.rel (%p237) target = $region78
        $region77: #{tpu_custom_call.1} parent=73 // pred_region
          _
        $region78: #{tpu_custom_call.1} parent=73 // pred_fallthru
          _
        %s240 = sand.u32 %s27, 1
        %s241 = sand.u32 %s27, 1
        %s242 = smul.addr %s241, 16
        %s243 = scalar_lea.vmem [#allocation2], %s242
        %p244 = pneg %p40
        %p245 = pneg %p37
        %p246 = pneg %p61
        %p247 = pneg %p58
        %p248 = pneg %p82
        %p249 = pneg %p79
        %p250 = pneg %p103
        %p251 = pneg %p100
        %p252 = pneg %p124
        %p253 = pneg %p121
        %p254 = pneg %p150
        %p255 = pneg %p147
        %s256 = sand.u32 %s137, 1
        %s257 = scalar_lea.sflag [#allocation4], %s256
        %s258 = sand.u32 %s137, 1
        %s259 = smul.addr %s258, 128
        %s260 = scalar_lea.vmem [#allocation3], %s259
        %s261 = smul.u32 16, %s19
        %v262 = vld [vmem:[%s236] sm:$0xff]
        %v263 = vld [vmem:[%s236 + $0x8] sm:$0x3f]
        %v264 = vld [vmem:[%s1] sm:$0xff]
        %v265 = vld [vmem:[%s1 + $0x8] sm:$0xff]
        %v266 = vld [vmem:[%s1 + $0x10] sm:$0xff]
        %v267 = vld [vmem:[%s1 + $0x18] sm:$0xff]
        %v268 = vld [vmem:[%s1 + $0x20] sm:$0xff]
        %v269 = vld [vmem:[%s1 + $0x28] sm:$0xff]
        %v270 = vld [vmem:[%s1 + $0x30] sm:$0xff]
        %v271 = vld [vmem:[%s1 + $0x38] sm:$0xff]
        %v272 = vld [vmem:[%s1 + $0x40] sm:$0xff]
        %v273 = vld [vmem:[%s1 + $0x48] sm:$0xff]
        %v274 = vld [vmem:[%s1 + $0x50] sm:$0xff]
        %v275 = vld [vmem:[%s1 + $0x58] sm:$0xff]
        %v276 = vld [vmem:[%s1 + $0x60] sm:$0xff]
        %v277 = vld [vmem:[%s1 + $0x68] sm:$0xff]
        %v278 = vld [vmem:[%s1 + $0x70] sm:$0xff]
        %v279 = vld [vmem:[%s1 + $0x78] sm:$0xff]
        %vm280 = vcmask 113664
        %v282 = vsel %vm280, %v264, 0
        %v285 = vsel %vm280, %v265, 0
        %v288 = vsel %vm280, %v266, 0
        %v291 = vsel %vm280, %v267, 0
        %v294 = vsel %vm280, %v268, 0
        %v297 = vsel %vm280, %v269, 0
        %v300 = vsel %vm280, %v270, 0
        %v303 = vsel %vm280, %v271, 0
        %v306 = vsel %vm280, %v272, 0
        %v309 = vsel %vm280, %v273, 0
        %v312 = vsel %vm280, %v274, 0
        %v315 = vsel %vm280, %v275, 0
        %v318 = vsel %vm280, %v276, 0
        %v321 = vsel %vm280, %v277, 0
        %v324 = vsel %vm280, %v278, 0
        %v327 = vsel %vm280, %v279, 0
        %vm329 = vcmask 1045504
        %v331 = vsel %vm329, %v263, 0
        %333 = vmatprep.subr.mxu0 0.0
        %334 = vmatpush1.msra.mxu0 %v262
        %335 = vmatprep.subr.mxu0 0.0
        %336 = vmatpush1.msra.mxu0 %v331
        %337 = vmatprep.subr.mxu0 0.0
        %338 = vmatpush1.msra.mxu0 0.0
        %339 = vmatprep.subr.mxu0 0.0
        %340 = vmatpush1.msra.mxu0 0.0
        %341 = vmatprep.subr.mxu0 0.0
        %342 = vmatpush1.msra.mxu0 0.0
        %343 = vmatprep.subr.mxu0 0.0
        %344 = vmatpush1.msra.mxu0 0.0
        %345 = vmatprep.subr.mxu0 0.0
        %346 = vmatpush1.msra.mxu0 0.0
        %347 = vmatprep.subr.mxu0 0.0
        %348 = vmatpush1.msra.mxu0 0.0
        %349 = vmatprep.subr.mxu0 0.0
        %350 = vmatpush1.msra.mxu0 0.0
        %351 = vmatprep.subr.mxu0 0.0
        %352 = vmatpush1.msra.mxu0 0.0
        %353 = vmatprep.subr.mxu0 0.0
        %354 = vmatpush1.msra.mxu0 0.0
        %355 = vmatprep.subr.mxu0 0.0
        %356 = vmatpush1.msra.mxu0 0.0
        %357 = vmatprep.subr.mxu0 0.0
        %358 = vmatpush1.msra.mxu0 0.0
        %359 = vmatprep.subr.mxu0 0.0
        %360 = vmatpush1.msra.mxu0 0.0
        %361 = vmatprep.subr.mxu0 0.0
        %362 = vmatpush1.msra.mxu0 0.0
        %363 = vmatprep.subr.mxu0 0.0
        %364 = vmatpush1.msra.mxu0 0.0
        %365 = vmatprep.subr.mxu0 0.0
        %366 = vmatpush1.msra.mxu0 0.0
        %367 = vmatprep.subr.mxu0 0.0
        %368 = vmatpush1.msra.mxu0 0.0
        %369 = vmatprep.subr.mxu0 0.0
        %370 = vmatpush1.msra.mxu0 0.0
        %371 = vmatprep.subr.mxu0 0.0
        %372 = vmatpush1.msra.mxu0 0.0
        %373 = vmatprep.subr.mxu0 0.0
        %374 = vmatpush1.msra.mxu0 0.0
        %375 = vmatprep.subr.mxu0 0.0
        %376 = vmatpush1.msra.mxu0 0.0
        %377 = vmatprep.subr.mxu0 0.0
        %378 = vmatpush1.msra.mxu0 0.0
        %379 = vmatprep.subr.mxu0 0.0
        %380 = vmatpush1.msra.mxu0 0.0
        %381 = vmatprep.subr.mxu0 0.0
        %382 = vmatpush1.msra.mxu0 0.0
        %383 = vmatprep.subr.mxu0 0.0
        %384 = vmatpush1.msra.mxu0 0.0
        %385 = vmatprep.subr.mxu0 0.0
        %386 = vmatpush1.msra.mxu0 0.0
        %387 = vmatprep.subr.mxu0 0.0
        %388 = vmatpush1.msra.mxu0 0.0
        %389 = vmatprep.subr.mxu0 0.0
        %390 = vmatpush1.msra.mxu0 0.0
        %391 = vmatprep.subr.mxu0 0.0
        %392 = vmatpush1.msra.mxu0 0.0
        %393 = vmatprep.subr.mxu0 0.0
        %394 = vmatpush1.msra.mxu0 0.0
        %395 = vmatprep.subr.mxu0 0.0
        %396 = vmatpush1.msra.mxu0 0.0
        %397 = vmatprep.mubr.f32.mxu0 0.0
        %398 = vmatmul.mubr.f32.gmra.mrb[0].mxu0 %v282
        %v399 = vpop.f32.mrb[0].mxu0
        %v400 = vadd.f32 0.0, %v399
        %v401 = vpop.f32.mrb[0].mxu0
        %402 = vmatprep.mubr.f32.mxu0 0.0
        %403 = vmatmul.mubr.f32.gmra.mrb[0].mxu0 %v285
        %v404 = vpop.f32.mrb[0].mxu0
        %v405 = vadd.f32 0.0, %v404
        %v406 = vpop.f32.mrb[0].mxu0
        %407 = vmatprep.mubr.f32.mxu0 0.0
        %408 = vmatmul.mubr.f32.gmra.mrb[0].mxu0 %v288
        %v409 = vpop.f32.mrb[0].mxu0
        %v410 = vadd.f32 0.0, %v409
        %v411 = vpop.f32.mrb[0].mxu0
        %412 = vmatprep.mubr.f32.mxu0 0.0
        %413 = vmatmul.mubr.f32.gmra.mrb[0].mxu0 %v291
        %v414 = vpop.f32.mrb[0].mxu0
        %v415 = vadd.f32 0.0, %v414
        %v416 = vpop.f32.mrb[0].mxu0
        %417 = vmatprep.mubr.f32.mxu0 0.0
        %418 = vmatmul.mubr.f32.gmra.mrb[0].mxu0 %v294
        %v419 = vpop.f32.mrb[0].mxu0
        %v420 = vadd.f32 0.0, %v419
        %v421 = vpop.f32.mrb[0].mxu0
        %422 = vmatprep.mubr.f32.mxu0 0.0
        %423 = vmatmul.mubr.f32.gmra.mrb[0].mxu0 %v297
        %v424 = vpop.f32.mrb[0].mxu0
        %v425 = vadd.f32 0.0, %v424
        %v426 = vpop.f32.mrb[0].mxu0
        %427 = vmatprep.mubr.f32.mxu0 0.0
        %428 = vmatmul.mubr.f32.gmra.mrb[0].mxu0 %v300
        %v429 = vpop.f32.mrb[0].mxu0
        %v430 = vadd.f32 0.0, %v429
        %v431 = vpop.f32.mrb[0].mxu0
        %432 = vmatprep.mubr.f32.mxu0 0.0
        %433 = vmatmul.mubr.f32.gmra.mrb[0].mxu0 %v303
        %v434 = vpop.f32.mrb[0].mxu0
        %v435 = vadd.f32 0.0, %v434
        %v436 = vpop.f32.mrb[0].mxu0
        %437 = vmatprep.mubr.f32.mxu0 0.0
        %438 = vmatmul.mubr.f32.gmra.mrb[0].mxu0 %v306
        %v439 = vpop.f32.mrb[0].mxu0
        %v440 = vadd.f32 0.0, %v439
        %v441 = vpop.f32.mrb[0].mxu0
        %442 = vmatprep.mubr.f32.mxu0 0.0
        %443 = vmatmul.mubr.f32.gmra.mrb[0].mxu0 %v309
        %v444 = vpop.f32.mrb[0].mxu0
        %v445 = vadd.f32 0.0, %v444
        %v446 = vpop.f32.mrb[0].mxu0
        %447 = vmatprep.mubr.f32.mxu0 0.0
        %448 = vmatmul.mubr.f32.gmra.mrb[0].mxu0 %v312
        %v449 = vpop.f32.mrb[0].mxu0
        %v450 = vadd.f32 0.0, %v449
        %v451 = vpop.f32.mrb[0].mxu0
        %452 = vmatprep.mubr.f32.mxu0 0.0
        %453 = vmatmul.mubr.f32.gmra.mrb[0].mxu0 %v315
        %v454 = vpop.f32.mrb[0].mxu0
        %v455 = vadd.f32 0.0, %v454
        %v456 = vpop.f32.mrb[0].mxu0
        %457 = vmatprep.mubr.f32.mxu0 0.0
        %458 = vmatmul.mubr.f32.gmra.mrb[0].mxu0 %v318
        %v459 = vpop.f32.mrb[0].mxu0
        %v460 = vadd.f32 0.0, %v459
        %v461 = vpop.f32.mrb[0].mxu0
        %462 = vmatprep.mubr.f32.mxu0 0.0
        %463 = vmatmul.mubr.f32.gmra.mrb[0].mxu0 %v321
        %v464 = vpop.f32.mrb[0].mxu0
        %v465 = vadd.f32 0.0, %v464
        %v466 = vpop.f32.mrb[0].mxu0
        %467 = vmatprep.mubr.f32.mxu0 0.0
        %468 = vmatmul.mubr.f32.gmra.mrb[0].mxu0 %v324
        %v469 = vpop.f32.mrb[0].mxu0
        %v470 = vadd.f32 0.0, %v469
        %v471 = vpop.f32.mrb[0].mxu0
        %472 = vmatprep.mubr.f32.mxu0 0.0
        %473 = vmatmul.mubr.f32.gmra.mrb[0].mxu0 %v327
        %v474 = vpop.f32.mrb[0].mxu0
        %v475 = vadd.f32 0.0, %v474
        %v476 = vpop.f32.mrb[0].mxu0
        %477 = vdwg.mxu0
        %478 = vxpose.xlu0.b32.start [1/16] %v400, 128
        %479 = vxpose.xlu0.b32.cont [2/16] %v405, 128
        %480 = vxpose.xlu0.b32.cont [3/16] %v410, 128
        %481 = vxpose.xlu0.b32.cont [4/16] %v415, 128
        %482 = vxpose.xlu0.b32.cont [5/16] %v420, 128
        %483 = vxpose.xlu0.b32.cont [6/16] %v425, 128
        %484 = vxpose.xlu0.b32.cont [7/16] %v430, 128
        %485 = vxpose.xlu0.b32.cont [8/16] %v435, 128
        %486 = vxpose.xlu0.b32.cont [9/16] %v440, 128
        %487 = vxpose.xlu0.b32.cont [10/16] %v445, 128
        %488 = vxpose.xlu0.b32.cont [11/16] %v450, 128
        %489 = vxpose.xlu0.b32.cont [12/16] %v455, 128
        %490 = vxpose.xlu0.b32.cont [13/16] %v460, 128
        %491 = vxpose.xlu0.b32.cont [14/16] %v465, 128
        %492 = vxpose.xlu0.b32.cont [15/16] %v470, 128
        %493 = vxpose.xlu0.b32.end [16/16] %v475, 128
        %v494 = vpop.trf.xlu0
        %v495 = vpop.trf.xlu0
        %v496 = vpop.trf.xlu0
        %v497 = vpop.trf.xlu0
        %v498 = vpop.trf.xlu0
        %v499 = vpop.trf.xlu0
        %v500 = vpop.trf.xlu0
        %v501 = vpop.trf.xlu0
        %v502 = vpop.trf.xlu0
        %v503 = vpop.trf.xlu0
        %v504 = vpop.trf.xlu0
        %v505 = vpop.trf.xlu0
        %v506 = vpop.trf.xlu0
        %v507 = vpop.trf.xlu0
        %v508 = vpop.trf.xlu0
        %v509 = vpop.trf.xlu0
        %v510 = vld [vmem:[%s2] sm:$0x1]
        %v512 = vlaneseq
        %v513 = vshrl.u32 %v512, 7
        %v514 = vsub.s32 0, %v513
        %v515 = vrot.slane %v510, %v514
        %v517 = vadd.f32 %v494, %v515
        %v518 = vadd.f32 %v495, %v515
        %v519 = vadd.f32 %v496, %v515
        %v520 = vadd.f32 %v497, %v515
        %v521 = vadd.f32 %v498, %v515
        %v522 = vadd.f32 %v499, %v515
        %v523 = vadd.f32 %v500, %v515
        %v524 = vadd.f32 %v501, %v515
        %v525 = vadd.f32 %v502, %v515
        %v526 = vadd.f32 %v503, %v515
        %v527 = vadd.f32 %v504, %v515
        %v528 = vadd.f32 %v505, %v515
        %v529 = vadd.f32 %v506, %v515
        %v530 = vadd.f32 %v507, %v515
        %v531 = vadd.f32 %v508, %v515
        %v532 = vadd.f32 %v509, %v515
        %533 = vadd.xlane.f32.xlu0 %v517
        %v534 = vpop.xlane.xlu0 %533
        %535 = vadd.xlane.f32.xlu0 %v518
        %v536 = vpop.xlane.xlu0 %535
        %537 = vadd.xlane.f32.xlu0 %v519
        %v538 = vpop.xlane.xlu0 %537
        %539 = vadd.xlane.f32.xlu0 %v520
        %v540 = vpop.xlane.xlu0 %539
        %541 = vadd.xlane.f32.xlu0 %v521
        %v542 = vpop.xlane.xlu0 %541
        %543 = vadd.xlane.f32.xlu0 %v522
        %v544 = vpop.xlane.xlu0 %543
        %545 = vadd.xlane.f32.xlu0 %v523
        %v546 = vpop.xlane.xlu0 %545
        %547 = vadd.xlane.f32.xlu0 %v524
        %v548 = vpop.xlane.xlu0 %547
        %549 = vadd.xlane.f32.xlu0 %v525
        %v550 = vpop.xlane.xlu0 %549
        %551 = vadd.xlane.f32.xlu0 %v526
        %v552 = vpop.xlane.xlu0 %551
        %553 = vadd.xlane.f32.xlu0 %v527
        %v554 = vpop.xlane.xlu0 %553
        %555 = vadd.xlane.f32.xlu0 %v528
        %v556 = vpop.xlane.xlu0 %555
        %557 = vadd.xlane.f32.xlu0 %v529
        %v558 = vpop.xlane.xlu0 %557
        %559 = vadd.xlane.f32.xlu0 %v530
        %v560 = vpop.xlane.xlu0 %559
        %561 = vadd.xlane.f32.xlu0 %v531
        %v562 = vpop.xlane.xlu0 %561
        %563 = vadd.xlane.f32.xlu0 %v532
        %v564 = vpop.xlane.xlu0 %563
        %v565 = vrcp.pop 128.0
        %v566 = vmul.f32 %v534, %v565
        %v567 = vmul.f32 %v536, %v565
        %v568 = vmul.f32 %v538, %v565
        %v569 = vmul.f32 %v540, %v565
        %v570 = vmul.f32 %v542, %v565
        %v571 = vmul.f32 %v544, %v565
        %v572 = vmul.f32 %v546, %v565
        %v573 = vmul.f32 %v548, %v565
        %v574 = vmul.f32 %v550, %v565
        %v575 = vmul.f32 %v552, %v565
        %v576 = vmul.f32 %v554, %v565
        %v577 = vmul.f32 %v556, %v565
        %v578 = vmul.f32 %v558, %v565
        %v579 = vmul.f32 %v560, %v565
        %v580 = vmul.f32 %v562, %v565
        %v581 = vmul.f32 %v564, %v565
        %v582 = vsub.f32 %v517, %v566
        %v583 = vsub.f32 %v518, %v567
        %v584 = vsub.f32 %v519, %v568
        %v585 = vsub.f32 %v520, %v569
        %v586 = vsub.f32 %v521, %v570
        %v587 = vsub.f32 %v522, %v571
        %v588 = vsub.f32 %v523, %v572
        %v589 = vsub.f32 %v524, %v573
        %v590 = vsub.f32 %v525, %v574
        %v591 = vsub.f32 %v526, %v575
        %v592 = vsub.f32 %v527, %v576
        %v593 = vsub.f32 %v528, %v577
        %v594 = vsub.f32 %v529, %v578
        %v595 = vsub.f32 %v530, %v579
        %v596 = vsub.f32 %v531, %v580
        %v597 = vsub.f32 %v532, %v581
        %v598 = vmul.f32 %v582, %v582
        %v599 = vmul.f32 %v583, %v583
        %v600 = vmul.f32 %v584, %v584
        %v601 = vmul.f32 %v585, %v585
        %v602 = vmul.f32 %v586, %v586
        %v603 = vmul.f32 %v587, %v587
        %v604 = vmul.f32 %v588, %v588
        %v605 = vmul.f32 %v589, %v589
        %v606 = vmul.f32 %v590, %v590
        %v607 = vmul.f32 %v591, %v591
        %v608 = vmul.f32 %v592, %v592
        %v609 = vmul.f32 %v593, %v593
        %v610 = vmul.f32 %v594, %v594
        %v611 = vmul.f32 %v595, %v595
        %v612 = vmul.f32 %v596, %v596
        %v613 = vmul.f32 %v597, %v597
        %614 = vadd.xlane.f32.xlu0 %v598
        %v615 = vpop.xlane.xlu0 %614
        %616 = vadd.xlane.f32.xlu0 %v599
        %v617 = vpop.xlane.xlu0 %616
        %618 = vadd.xlane.f32.xlu0 %v600
        %v619 = vpop.xlane.xlu0 %618
        %620 = vadd.xlane.f32.xlu0 %v601
        %v621 = vpop.xlane.xlu0 %620
        %622 = vadd.xlane.f32.xlu0 %v602
        %v623 = vpop.xlane.xlu0 %622
        %624 = vadd.xlane.f32.xlu0 %v603
        %v625 = vpop.xlane.xlu0 %624
        %626 = vadd.xlane.f32.xlu0 %v604
        %v627 = vpop.xlane.xlu0 %626
        %628 = vadd.xlane.f32.xlu0 %v605
        %v629 = vpop.xlane.xlu0 %628
        %630 = vadd.xlane.f32.xlu0 %v606
        %v631 = vpop.xlane.xlu0 %630
        %632 = vadd.xlane.f32.xlu0 %v607
        %v633 = vpop.xlane.xlu0 %632
        %634 = vadd.xlane.f32.xlu0 %v608
        %v635 = vpop.xlane.xlu0 %634
        %636 = vadd.xlane.f32.xlu0 %v609
        %v637 = vpop.xlane.xlu0 %636
        %638 = vadd.xlane.f32.xlu0 %v610
        %v639 = vpop.xlane.xlu0 %638
        %640 = vadd.xlane.f32.xlu0 %v611
        %v641 = vpop.xlane.xlu0 %640
        %642 = vadd.xlane.f32.xlu0 %v612
        %v643 = vpop.xlane.xlu0 %642
        %644 = vadd.xlane.f32.xlu0 %v613
        %v645 = vpop.xlane.xlu0 %644
        %v646 = vmul.f32 %v615, %v565
        %v647 = vmul.f32 %v617, %v565
        %v648 = vmul.f32 %v619, %v565
        %v649 = vmul.f32 %v621, %v565
        %v650 = vmul.f32 %v623, %v565
        %v651 = vmul.f32 %v625, %v565
        %v652 = vmul.f32 %v627, %v565
        %v653 = vmul.f32 %v629, %v565
        %v654 = vmul.f32 %v631, %v565
        %v655 = vmul.f32 %v633, %v565
        %v656 = vmul.f32 %v635, %v565
        %v657 = vmul.f32 %v637, %v565
        %v658 = vmul.f32 %v639, %v565
        %v659 = vmul.f32 %v641, %v565
        %v660 = vmul.f32 %v643, %v565
        %v661 = vmul.f32 %v645, %v565
        %v662 = vadd.f32 %v646, 1e-05
        %v663 = vadd.f32 %v647, 1e-05
        %v664 = vadd.f32 %v648, 1e-05
        %v665 = vadd.f32 %v649, 1e-05
        %v666 = vadd.f32 %v650, 1e-05
        %v667 = vadd.f32 %v651, 1e-05
        %v668 = vadd.f32 %v652, 1e-05
        %v669 = vadd.f32 %v653, 1e-05
        %v670 = vadd.f32 %v654, 1e-05
        %v671 = vadd.f32 %v655, 1e-05
        %v672 = vadd.f32 %v656, 1e-05
        %v673 = vadd.f32 %v657, 1e-05
        %v674 = vadd.f32 %v658, 1e-05
        %v675 = vadd.f32 %v659, 1e-05
        %v676 = vadd.f32 %v660, 1e-05
        %v677 = vadd.f32 %v661, 1e-05
        %v678 = vrsqrt.pop %v662
        %v679 = vrsqrt.pop %v663
        %v680 = vrsqrt.pop %v664
        %v681 = vrsqrt.pop %v665
        %v682 = vrsqrt.pop %v666
        %v683 = vrsqrt.pop %v667
        %v684 = vrsqrt.pop %v668
        %v685 = vrsqrt.pop %v669
        %v686 = vrsqrt.pop %v670
        %v687 = vrsqrt.pop %v671
        %v688 = vrsqrt.pop %v672
        %v689 = vrsqrt.pop %v673
        %v690 = vrsqrt.pop %v674
        %v691 = vrsqrt.pop %v675
        %v692 = vrsqrt.pop %v676
        %v693 = vrsqrt.pop %v677
        %v694 = vmul.f32 %v582, %v678
        %v695 = vmul.f32 %v583, %v679
        %v696 = vmul.f32 %v584, %v680
        %v697 = vmul.f32 %v585, %v681
        %v698 = vmul.f32 %v586, %v682
        %v699 = vmul.f32 %v587, %v683
        %v700 = vmul.f32 %v588, %v684
        %v701 = vmul.f32 %v589, %v685
        %v702 = vmul.f32 %v590, %v686
        %v703 = vmul.f32 %v591, %v687
        %v704 = vmul.f32 %v592, %v688
        %v705 = vmul.f32 %v593, %v689
        %v706 = vmul.f32 %v594, %v690
        %v707 = vmul.f32 %v595, %v691
        %v708 = vmul.f32 %v596, %v692
        %v709 = vmul.f32 %v597, %v693
        %v710 = vld [vmem:[%s3] sm:$0x1]
        %v712 = vlaneseq
        %v713 = vshrl.u32 %v712, 7
        %v714 = vsub.s32 0, %v713
        %v715 = vrot.slane %v710, %v714
        %v717 = vmul.f32 %v694, %v715
        %v718 = vmul.f32 %v695, %v715
        %v719 = vmul.f32 %v696, %v715
        %v720 = vmul.f32 %v697, %v715
        %v721 = vmul.f32 %v698, %v715
        %v722 = vmul.f32 %v699, %v715
        %v723 = vmul.f32 %v700, %v715
        %v724 = vmul.f32 %v701, %v715
        %v725 = vmul.f32 %v702, %v715
        %v726 = vmul.f32 %v703, %v715
        %v727 = vmul.f32 %v704, %v715
        %v728 = vmul.f32 %v705, %v715
        %v729 = vmul.f32 %v706, %v715
        %v730 = vmul.f32 %v707, %v715
        %v731 = vmul.f32 %v708, %v715
        %v732 = vmul.f32 %v709, %v715
        %v733 = vld [vmem:[%s4] sm:$0x1]
        %v735 = vlaneseq
        %v736 = vshrl.u32 %v735, 7
        %v737 = vsub.s32 0, %v736
        %v738 = vrot.slane %v733, %v737
        %v740 = vadd.f32 %v717, %v738
        %v741 = vadd.f32 %v718, %v738
        %v742 = vadd.f32 %v719, %v738
        %v743 = vadd.f32 %v720, %v738
        %v744 = vadd.f32 %v721, %v738
        %v745 = vadd.f32 %v722, %v738
        %v746 = vadd.f32 %v723, %v738
        %v747 = vadd.f32 %v724, %v738
        %v748 = vadd.f32 %v725, %v738
        %v749 = vadd.f32 %v726, %v738
        %v750 = vadd.f32 %v727, %v738
        %v751 = vadd.f32 %v728, %v738
        %v752 = vadd.f32 %v729, %v738
        %v753 = vadd.f32 %v730, %v738
        %v754 = vadd.f32 %v731, %v738
        %v755 = vadd.f32 %v732, %v738
        %756 = vst [vmem:[%s260] sm:$0xff] %v740
        %757 = vst [vmem:[%s260 + $0x8] sm:$0xff] %v741
        %758 = vst [vmem:[%s260 + $0x10] sm:$0xff] %v742
        %759 = vst [vmem:[%s260 + $0x18] sm:$0xff] %v743
        %760 = vst [vmem:[%s260 + $0x20] sm:$0xff] %v744
        %761 = vst [vmem:[%s260 + $0x28] sm:$0xff] %v745
        %762 = vst [vmem:[%s260 + $0x30] sm:$0xff] %v746
        %763 = vst [vmem:[%s260 + $0x38] sm:$0xff] %v747
        %764 = vst [vmem:[%s260 + $0x40] sm:$0xff] %v748
        %765 = vst [vmem:[%s260 + $0x48] sm:$0xff] %v749
        %766 = vst [vmem:[%s260 + $0x50] sm:$0xff] %v750
        %767 = vst [vmem:[%s260 + $0x58] sm:$0xff] %v751
        %768 = vst [vmem:[%s260 + $0x60] sm:$0xff] %v752
        %769 = vst [vmem:[%s260 + $0x68] sm:$0xff] %v753
        %770 = vst [vmem:[%s260 + $0x70] sm:$0xff] %v754
        %771 = vst [vmem:[%s260 + $0x78] sm:$0xff] %v755
        %s772 = sand.u32 %s137, 1
        %s773 = scalar_lea.sflag [#allocation4], %s772
        %s774 = sand.u32 %s137, 1
        %s775 = smul.addr %s774, 128
        %s776 = scalar_lea.vmem [#allocation3], %s775
        // Predicated region
        $region79: #{tpu_custom_call.1} parent=73 // pred_check
          %p777 = pneg %p147
        $region80: #{tpu_custom_call.1} parent=73 // pred_check_branch
          %779 = sbr.rel (%p777) target = $region82
        $region81: #{tpu_custom_call.1} parent=73 // pred_region
          %s780 = smul.u32 16, %s19
          %s782 = ssub.s32 2048, 2048
          %783 = vsyncadd %s773, %s782
          %s784 = smul.addr %s780, 128
          %s785 = scalar_lea.hbm %s5, %s784
          %s786 = sshll.u32 %s776, 4
          %s787 = int_to_ptr.vmem [resolvable:$true] %s786
          %792 = dma.vmem_to_hbm [thread:$0]  %s787, 2048, %s785, %s773, 128, 128, 8
        $region82: #{tpu_custom_call.1} parent=73 // pred_fallthru
          _
      $region74: #{tpu_custom_call.1} parent=5 // pred_fallthru
        _
      %p793 = scmp.le.s32.totalorder 2, %s14
      // Predicated region
      $region83: #{tpu_custom_call.1} parent=5 // pred_check
        %p794 = pneg %p793
      $region84: #{tpu_custom_call.1} parent=5 // pred_check_branch
        %796 = sbr.rel (%p794) target = $region86
      $region85: #{tpu_custom_call.1} parent=5 // pred_region
        %s797 = ssub.s32 %s14, 2
        // Predicated region
        $region87: #{tpu_custom_call.1} parent=85 // pred_check
          %p798 = pneg %p153
        $region88: #{tpu_custom_call.1} parent=85 // pred_check_branch
          %800 = sbr.rel (%p798) target = $region90
        $region89: #{tpu_custom_call.1} parent=85 // pred_region
          %s801 = sand.u32 %s138, 1
          %s802 = scalar_lea.sflag [#allocation4], %s801
          %s803 = sand.u32 %s138, 1
          %s804 = smul.addr %s803, 128
          %s805 = scalar_lea.vmem [#allocation3], %s804
          %806 = dma.done %s802, 2048
        $region90: #{tpu_custom_call.1} parent=85 // pred_fallthru
          _
      $region86: #{tpu_custom_call.1} parent=5 // pred_fallthru
        _
    $region6: #{tpu_custom_call.1} parent=1 // loop_footer
      %s18 = sadd.s32 1, %s14
    $region7: #{tpu_custom_call.1} parent=1 // loop_footer_branch
      %13 = sbr.rel target = $region3
    $region8: #{tpu_custom_call.1} parent=1 // loop_exit
      _
    %807 = vsyncpa [#allocation4], 1
    %s808 = scalar_lea.sflag [#allocation4], 1
    %809 = vsyncpa %s808, 1

</llo_original>
